<compile_context>
chip_gen: v6e
topology: v6e:2x2x1
jax: 0.10.0
libtpu: 0.0.40
codegen_flags: <defaults>
</compile_context>

<pallas_src>
from typing import NamedTuple

import jax
import jax.numpy as jnp
from jax import lax
from jax.experimental import pallas as pl
from jax.experimental.pallas import tpu as pltpu

_LANE = 128


def _round_up(x, m):
    return ((x + m - 1) // m) * m


def _sublane(dtype):
    return 16 if dtype == jnp.bfloat16 else 8


def _select_kn_tiles(K, N):
    """Tile sizes for the K (reduction) and N (output lane) axes."""
    tk = min(512, _round_up(K, _LANE))
    tn_full = _round_up(N, _LANE)
    tn = min(512, tn_full)
    # v7x shards the "parallel" grid axes across its 2 TensorCores.  If M
    # collapses to one block (decode-like shapes), make sure the j axis still
    # contributes >= 2 blocks whenever N spans more than one lane tile.
    if tn_full > _LANE and _round_up(N, tn) // tn < 2:
        tn = max(_LANE, _round_up((N + 1) // 2, _LANE))
    return tk, tn


class PreparedWeight(NamedTuple):
    w_kn: jax.Array  # (Kp, Np) zero-padded, already transposed to (K, N)
    n: int           # original output_size
    k: int           # original input_size_per_partition
    tk: int
    tn: int


def prepare_row_parallel_weight(weight, *, tk=None, tn=None):
    """One-time weight layout: (N, K) -> zero-padded, transposed (Kp, Np).

    Doing the transpose + tile padding once at init amortizes the extra HBM
    round trip across every forward call and lets the kernel consume a plain
    (m,k)x(k,n) MXU contraction (no per-tile transpose of the weight tile).
    """
    N, K = weight.shape
    tk_sel, tn_sel = _select_kn_tiles(K, N)
    tk = tk or tk_sel
    tn = tn or tn_sel
    Kp, Np = _round_up(K, tk), _round_up(N, tn)
    w_kn = jnp.transpose(weight)  # (K, N)
    if (Kp, Np) != (K, N):
        # Zero padding on the K edge is required for correctness: the padded K
        # rows (matched by zero-padded x columns) contribute nothing to the sum.
        w_kn = jnp.pad(w_kn, ((0, Kp - K), (0, Np - N)))
    return PreparedWeight(w_kn=w_kn, n=N, k=K, tk=tk, tn=tn)


# ---------------------------------------------------------------------------
# Kernels.  f32 output -> accumulate directly into the resident output block;
# other dtypes -> f32 VMEM accumulator + epilogue cast.  Bias (when present)
# is folded into the k==0 init instead of an epilogue add.
# ---------------------------------------------------------------------------

def _dot(x, w):
    return jnp.dot(x, w, preferred_element_type=jnp.float32)


def _mm_kernel_f32(x_ref, w_ref, o_ref):
    @pl.when(pl.program_id(2) == 0)
    def _():
        o_ref[...] = jnp.zeros_like(o_ref)

    o_ref[...] += _dot(x_ref[...], w_ref[...])


def _mm_bias_kernel_f32(x_ref, w_ref, b_ref, o_ref):
    @pl.when(pl.program_id(2) == 0)
    def _():
        o_ref[...] = jnp.broadcast_to(
            b_ref[...].astype(jnp.float32), o_ref.shape)

    o_ref[...] += _dot(x_ref[...], w_ref[...])


def _mm_kernel_acc(x_ref, w_ref, o_ref, acc_ref):
    k = pl.program_id(2)

    @pl.when(k == 0)
    def _():
        acc_ref[...] = jnp.zeros_like(acc_ref)

    acc_ref[...] += _dot(x_ref[...], w_ref[...])

    @pl.when(k == pl.num_programs(2) - 1)
    def _():
        o_ref[...] = acc_ref[...].astype(o_ref.dtype)


def _mm_bias_kernel_acc(x_ref, w_ref, b_ref, o_ref, acc_ref):
    k = pl.program_id(2)

    @pl.when(k == 0)
    def _():
        acc_ref[...] = jnp.broadcast_to(
            b_ref[...].astype(jnp.float32), acc_ref.shape)

    acc_ref[...] += _dot(x_ref[...], w_ref[...])

    @pl.when(k == pl.num_programs(2) - 1)
    def _():
        o_ref[...] = acc_ref[...].astype(o_ref.dtype)


# ---------------------------------------------------------------------------
# Wrapper
# ---------------------------------------------------------------------------

def row_parallel_linear(x, prepared, bias=None, *, tm=None,
                        allow_xla_fallback=False):
    """Local matmul of RowParallelLinear: y = x @ W.T (+ bias).

    x: (..., K); prepared: PreparedWeight (or raw (N, K) weight, prepped on the
    fly); bias: (N,) effective bias or None.  Returns (..., N).
    """
    if not isinstance(prepared, PreparedWeight):
        prepared = prepare_row_parallel_weight(prepared)

    *lead, K = x.shape
    assert K == prepared.k, (K, prepared.k)
    N = prepared.n
    Kp, Np = prepared.w_kn.shape
    tk, tn = prepared.tk, prepared.tn
    out_dtype = x.dtype
    has_bias = bias is not None

    M = 1
    for d in lead:
        M *= d

    sub = _sublane(x.dtype)
    tm = tm or min(512, _round_up(M, sub))
    Mp = _round_up(M, tm)

    grid = (Mp // tm, Np // tn, Kp // tk)

    x2d = x.reshape(M, K)

    if allow_xla_fallback and grid[0] * grid[1] * grid[2] == 1:
        # Tiny shapes: pad/reshape HLOs + pallas_call fixed overhead dominate;
        # XLA's fused matmul is strictly faster there.
        out2d = jnp.dot(x2d, prepared.w_kn[:K, :N],
                        preferred_element_type=jnp.float32)
        if has_bias:
            out2d = out2d + bias.astype(jnp.float32)
        return out2d.astype(out_dtype).reshape(*lead, N)

    if (Mp, Kp) != (M, K):
        x2d = jnp.pad(x2d, ((0, Mp - M), (0, Kp - K)))
    if has_bias:
        b2d = jnp.pad(bias.astype(jnp.float32), (0, Np - N)).reshape(1, Np)

    x_spec = pl.BlockSpec((tm, tk), lambda i, j, k: (i, k))
    w_spec = pl.BlockSpec((tk, tn), lambda i, j, k: (k, j))   # (K, N) layout
    b_spec = pl.BlockSpec((1, tn), lambda i, j, k: (0, j))
    o_spec = pl.BlockSpec((tm, tn), lambda i, j, k: (i, j))

    if out_dtype == jnp.float32:
        kernel = _mm_bias_kernel_f32 if has_bias else _mm_kernel_f32
        scratch_shapes = []
    else:
        kernel = _mm_bias_kernel_acc if has_bias else _mm_kernel_acc
        scratch_shapes = [pltpu.VMEM((tm, tn), jnp.float32)]

    in_specs = [x_spec, w_spec] + ([b_spec] if has_bias else [])
    operands = (x2d, prepared.w_kn) + ((b2d,) if has_bias else ())

    x_bytes = x2d.dtype.itemsize
    w_bytes = prepared.w_kn.dtype.itemsize
    o_bytes = jnp.dtype(out_dtype).itemsize
    cost = pl.CostEstimate(
        flops=2 * Mp * Np * Kp,
        transcendentals=0,
        bytes_accessed=int(
            Mp * Kp * (Np // tn) * x_bytes        # x re-streamed per j block
            + Kp * Np * (Mp // tm) * w_bytes      # W re-streamed per i block
            + Mp * Np * o_bytes                   # output written once
        ),
    )

    # Double-buffered tile footprint (f32 accumulator included) + headroom.
    # Stays well under every generation's physical VMEM (v7x: 64 MiB).
    tile_bytes = 4 * (tm * tk + tk * tn + 2 * tm * tn)
    vmem_limit = int(min(96 << 20, max(32 << 20, 4 * tile_bytes)))

    out2d = pl.pallas_call(
        kernel,
        out_shape=jax.ShapeDtypeStruct((Mp, Np), out_dtype),
        grid_spec=pltpu.PrefetchScalarGridSpec(
            num_scalar_prefetch=0,
            grid=grid,
            in_specs=in_specs,
            out_specs=o_spec,
            scratch_shapes=scratch_shapes,
        ),
        compiler_params=pltpu.CompilerParams(
            dimension_semantics=("parallel", "parallel", "arbitrary"),
            vmem_limit_bytes=vmem_limit,
        ),
        cost_estimate=cost,
    )(*operands)

    return out2d[:M, :N].reshape(*lead, N)


def row_parallel_linear_forward(x, weight, bias, add_bias, *,
                                allow_xla_fallback=False):
    """Full module forward: matmul (+bias), identity all-reduce, (+bias) again.

    NOTE: the reference adds self.bias inside LinearWithAsyncCommunication AND
    again after the all-reduce, so the effective bias is 2*bias.  This matches
    the PyTorch module exactly (bias is zero-initialized there); it is fused
    into a single kernel-side bias term.
    """
    prepared = (weight if isinstance(weight, PreparedWeight)
                else prepare_row_parallel_weight(weight))
    eff_bias = (bias * 2.0) if (add_bias and bias is not None) else None
    return row_parallel_linear(x, prepared, eff_bias,
                               allow_xla_fallback=allow_xla_fallback)


def make_row_parallel_linear_params(input_size, output_size, add_bias=False, *,
                                    world_size=1, rank=0, dtype=jnp.float32):
    """Deterministic init matching the PyTorch module's __init__."""
    in_per_partition = input_size // world_size
    idx = jnp.arange(in_per_partition * output_size, dtype=jnp.float32)
    weight = (
        jnp.cos(idx.reshape(output_size, in_per_partition) * (0.5 ** rank)) * 0.1
    ).astype(dtype)
    bias = jnp.zeros((output_size,), dtype=dtype) if add_bias else None
    return weight, bias


if __name__ == "__main__":
    def _ref_forward(x, weight, bias, add_bias):
        # Mirrors the PyTorch forward: matmul + bias inside
        # LinearWithAsyncCommunication, identity all-reduce, then + bias again.
        ref = jnp.matmul(x, weight.T, precision=lax.Precision.HIGHEST)
        if add_bias:
            ref = ref + bias
            ref = ref + bias
        return ref

    key = jax.random.PRNGKey(0)
    k1, k2 = jax.random.split(key)

    # --- Small shapes consistent with the module: batch=2, seq=8, hidden=32.
    batch, seq, input_size, output_size = 2, 8, 32, 64
    add_bias = True
    weight, bias = make_row_parallel_linear_params(
        input_size, output_size, add_bias=add_bias, world_size=1, rank=0)
    prepared = prepare_row_parallel_weight(weight)   # one-time weight layout

    x_small = jax.random.normal(k1, (batch, seq, input_size), dtype=jnp.float32)
    out_small = jax.block_until_ready(
        row_parallel_linear_forward(x_small, prepared, bias, add_bias))
    ref_small = _ref_forward(x_small, weight, bias, add_bias)
    assert out_small.shape == (batch, seq, output_size)
    assert jnp.allclose(out_small, ref_small, atol=1e-5, rtol=1e-5)

    # Opt-in XLA fallback path for tiny shapes -- sanity check only.
    out_fb = jax.block_until_ready(
        row_parallel_linear_forward(x_small, prepared, bias, add_bias,
                                    allow_xla_fallback=True))
    assert jnp.allclose(out_fb, ref_small, atol=1e-5, rtol=1e-5)

    # --- Slightly larger shape: exercises the multi-block grid, the K
    #     reduction loop (2 steps), and the >=2 N-block rule (v7x megacore).
    b2, s2, in2, n2 = 2, 128, 1024, 384
    weight2, bias2 = make_row_parallel_linear_params(in2, n2, add_bias=True)
    prepared2 = prepare_row_parallel_weight(weight2)
    x_med = jax.random.normal(k2, (b2, s2, in2), dtype=jnp.float32)
    out_med = jax.block_until_ready(
        row_parallel_linear_forward(x_med, prepared2, bias2, True))
    ref_med = _ref_forward(x_med, weight2, bias2, True)
    assert out_med.shape == (b2, s2, n2)
    assert jnp.allclose(out_med, ref_med, atol=1e-3, rtol=1e-3)

    print("KERNEL_OK")
</pallas_src>

<mosaic_0001>
module attributes {stable_mosaic.version = 11 : i64} {
  func.func @_mm_bias_kernel_f32(%arg0: i32, %arg1: i32, %arg2: i32, %arg3: memref<16x128xf32, #tpu.memory_space<vmem>>, %arg4: memref<128x128xf32, #tpu.memory_space<vmem>>, %arg5: memref<1x128xf32, #tpu.memory_space<vmem>>, %arg6: memref<16x128xf32, #tpu.memory_space<vmem>>) attributes {dimension_semantics = [#tpu.dimension_semantics<parallel>, #tpu.dimension_semantics<parallel>, #tpu.dimension_semantics<arbitrary>], iteration_bounds = array<i64: 1, 1, 1>, scalar_prefetch = 0 : i64, scratch_operands = 0 : i64, tpu.core_type = #tpu.core_type<tc>, window_params = [{transform_indices = @transform_0, window_bounds = array<i64: 16, 128>}, {transform_indices = @transform_1, window_bounds = array<i64: 128, 128>}, {transform_indices = @transform_2, window_bounds = array<i64: 1, 128>}, {transform_indices = @transform_3, window_bounds = array<i64: 16, 128>}]} {
    %c0_i32 = arith.constant 0 : i32
    %0 = arith.cmpi eq, %arg2, %c0_i32 : i32
    %1 = arith.extui %0 : i1 to i32
    %c0_i32_0 = arith.constant 0 : i32
    %2 = arith.cmpi ne, %1, %c0_i32_0 : i32
    scf.if %2 {
      %c0_8 = arith.constant 0 : index
      %c0_9 = arith.constant 0 : index
      %9 = vector.load %arg5[%c0_8, %c0_9] : memref<1x128xf32, #tpu.memory_space<vmem>>, vector<1x128xf32>
      %10 = vector.shape_cast %9 : vector<1x128xf32> to vector<1x128xf32>
      %11 = vector.broadcast %10 : vector<1x128xf32> to vector<16x128xf32>
      %c0_10 = arith.constant 0 : index
      %c0_11 = arith.constant 0 : index
      %12 = vector.load %arg6[%c0_10, %c0_11] : memref<16x128xf32, #tpu.memory_space<vmem>>, vector<16x128xf32>
      tpu.vector_store %arg6[%c0_10, %c0_11], %11 {strides = array<i32>} : memref<16x128xf32, #tpu.memory_space<vmem>>, vector<16x128xf32>,
    } else {
    }
    %c0 = arith.constant 0 : index
    %c0_1 = arith.constant 0 : index
    %3 = vector.load %arg6[%c0, %c0_1] : memref<16x128xf32, #tpu.memory_space<vmem>>, vector<16x128xf32>
    %c0_2 = arith.constant 0 : index
    %c0_3 = arith.constant 0 : index
    %4 = vector.load %arg3[%c0_2, %c0_3] : memref<16x128xf32, #tpu.memory_space<vmem>>, vector<16x128xf32>
    %c0_4 = arith.constant 0 : index
    %c0_5 = arith.constant 0 : index
    %5 = vector.load %arg4[%c0_4, %c0_5] : memref<128x128xf32, #tpu.memory_space<vmem>>, vector<128x128xf32>
    %cst = arith.constant dense<0.000000e+00> : vector<16x128xf32>
    %6 = tpu.matmul %4, %5, %cst {dimension_numbers = #tpu.dot_dimension_numbers<[1], [0], [0], [1], [0, 0, 1, 1], [], []>} : vector<16x128xf32>, vector<128x128xf32>, vector<16x128xf32> -> vector<16x128xf32>
    %7 = arith.addf %3, %6 : vector<16x128xf32>
    %c0_6 = arith.constant 0 : index
    %c0_7 = arith.constant 0 : index
    %8 = vector.load %arg6[%c0_6, %c0_7] : memref<16x128xf32, #tpu.memory_space<vmem>>, vector<16x128xf32>
    tpu.vector_store %arg6[%c0_6, %c0_7], %7 {strides = array<i32>} : memref<16x128xf32, #tpu.memory_space<vmem>>, vector<16x128xf32>,
    return
  }
  func.func @transform_0(%arg0: i32, %arg1: i32, %arg2: i32) -> (i32, i32) {
    %c0_i32 = arith.constant 0 : i32
    return %arg0, %arg2 : i32, i32
  }
  func.func @transform_1(%arg0: i32, %arg1: i32, %arg2: i32) -> (i32, i32) {
    %c0_i32 = arith.constant 0 : i32
    return %arg2, %arg1 : i32, i32
  }
  func.func @transform_2(%arg0: i32, %arg1: i32, %arg2: i32) -> (i32, i32) {
    %c0_i32 = arith.constant 0 : i32
    %c0_i32_0 = arith.constant 0 : i32
    return %c0_i32, %arg1 : i32, i32
  }
  func.func @transform_3(%arg0: i32, %arg1: i32, %arg2: i32) -> (i32, i32) {
    %c0_i32 = arith.constant 0 : i32
    return %arg0, %arg1 : i32, i32
  }
}

</mosaic_0001>

<llo_original>
// kernel: tpu_custom_call.1
$region0: #{tpu_custom_call.1}
  #allocation0 [shape = 'u32[]', space=smem, size = 0x4, offset = 0x4, fixed_abs, tag = 'smem constant byte address 0x4 - core index']
  #allocation1 [shape = 'u32[144,128]{1,0:T(1,128)}', space=vmem, size = 0x12000, scoped, tag = 'internal scratch']
  %s0 = inlined_call_operand.hbm [shape: f32[16,128], index: 0, kind: input, shape index: {}]
  %s1 = inlined_call_operand.hbm [shape: f32[128,128], index: 1, kind: input, shape index: {}]
  %s2 = inlined_call_operand.vmem [shape: f32[1,128], index: 2, kind: input, shape index: {}]
  %s3 = inlined_call_operand.hbm [shape: f32[16,128], index: 3, kind: output, shape index: {}]
  %s4 = sld [smem:[#allocation0]]
  $region34: #{tpu_custom_call.1} parent=0
    _
  %s6 = ssub.s32 1, %s4
  %s7 = scalar_select 0, %s6, %s4
  $region1: #{tpu_custom_call.1} parent=0
    #allocation2 [shape = 'u8[8192]{0}', space=vmem, size = 0x2000, scoped, tag = 'input window, operand 0, single buffered']
    #allocation3 [shape = 's32[1]{0}', space=sflag, size = 0x4, scoped, tag = 'scoped memory for tpu_custom_call.1']
    #allocation4 [shape = 's32[1]{0}', space=sflag, size = 0x4, scoped, tag = 'scoped memory for tpu_custom_call.1']
    #allocation5 [shape = 'u8[65536]{0}', space=vmem, size = 0x10000, scoped, tag = 'input window, operand 1, single buffered']
    #allocation6 [shape = 's32[1]{0}', space=sflag, size = 0x4, scoped, tag = 'scoped memory for tpu_custom_call.1']
    #allocation7 [shape = 'u8[8192]{0}', space=vmem, size = 0x2000, scoped, tag = 'output window, operand 0, single buffered']
    %8 = vsyncpa [#allocation3], 0
    %9 = vsyncpa [#allocation6], 0
    %10 = vsyncpa [#allocation4], 0
    // Predicated region
    $region2: #{tpu_custom_call.1} parent=1 // pred_check
      _
    $region3: #{tpu_custom_call.1} parent=1 // pred_check_branch
      %12 = sbr.rel (0) target = $region5
    $region4: #{tpu_custom_call.1} parent=1 // pred_region
      %s14 = ssub.s32 256, 256
      %15 = vsyncadd [#allocation3], %s14
      %s16 = sshll.u32 [#allocation2], 4
      %s17 = int_to_ptr.vmem [resolvable:$true] %s16
      %22 = dma.hbm_to_vmem [thread:$0]  %s0, 256, %s17, [#allocation3], 128, 128, 8
    $region5: #{tpu_custom_call.1} parent=1 // pred_fallthru
      _
    // Predicated region
    $region6: #{tpu_custom_call.1} parent=1 // pred_check
      _
    $region7: #{tpu_custom_call.1} parent=1 // pred_check_branch
      %24 = sbr.rel (0) target = $region9
    $region8: #{tpu_custom_call.1} parent=1 // pred_region
      %s26 = ssub.s32 2048, 2048
      %27 = vsyncadd [#allocation6], %s26
      %s28 = sshll.u32 [#allocation5], 4
      %s29 = int_to_ptr.vmem [resolvable:$true] %s28
      %34 = dma.hbm_to_vmem [thread:$0]  %s1, 2048, %s29, [#allocation6], 128, 128, 8
    $region9: #{tpu_custom_call.1} parent=1 // pred_fallthru
      _
    // Predicated region
    $region10: #{tpu_custom_call.1} parent=1 // pred_check
      _
    $region11: #{tpu_custom_call.1} parent=1 // pred_check_branch
      %36 = sbr.rel (0) target = $region13
    $region12: #{tpu_custom_call.1} parent=1 // pred_region
      _
    $region13: #{tpu_custom_call.1} parent=1 // pred_fallthru
      _
    // Predicated region
    $region14: #{tpu_custom_call.1} parent=1 // pred_check
      _
    $region15: #{tpu_custom_call.1} parent=1 // pred_check_branch
      %38 = sbr.rel (0) target = $region17
    $region16: #{tpu_custom_call.1} parent=1 // pred_region
      %39 = dma.done [#allocation3], 256
    $region17: #{tpu_custom_call.1} parent=1 // pred_fallthru
      _
    // Predicated region
    $region18: #{tpu_custom_call.1} parent=1 // pred_check
      _
    $region19: #{tpu_custom_call.1} parent=1 // pred_check_branch
      %41 = sbr.rel (0) target = $region21
    $region20: #{tpu_custom_call.1} parent=1 // pred_region
      %42 = dma.done [#allocation6], 2048
    $region21: #{tpu_custom_call.1} parent=1 // pred_fallthru
      _
    %p43 = scmp.eq.s32.totalorder 0, 0
    // Predicated region
    $region22: #{tpu_custom_call.1} parent=1 // pred_check
      %p44 = pneg %p43
    $region23: #{tpu_custom_call.1} parent=1 // pred_check_branch
      %46 = sbr.rel (%p44) target = $region25
    $region24: #{tpu_custom_call.1} parent=1 // pred_region
      %v47 = vld [vmem:[%s2] sm:$0x1]
      %v49 = vlaneseq
      %v50 = vshrl.u32 %v49, 7
      %v51 = vsub.s32 0, %v50
      %v52 = vrot.slane %v47, %v51
      %54 = vst [vmem:[#allocation7] sm:$0xff] %v52
      %55 = vst [vmem:[#allocation7 + $0x8] sm:$0xff] %v52
    $region25: #{tpu_custom_call.1} parent=1 // pred_fallthru
      _
    %v56 = vld [vmem:[#allocation7] sm:$0xff]
    %v57 = vld [vmem:[#allocation7 + $0x8] sm:$0xff]
    %v58 = vld [vmem:[#allocation2] sm:$0xff]
    %v59 = vld [vmem:[#allocation2 + $0x8] sm:$0xff]
    %v60 = vld [vmem:[#allocation5] sm:$0xff]
    %v61 = vld [vmem:[#allocation5 + $0x8] sm:$0xff]
    %v62 = vld [vmem:[#allocation5 + $0x10] sm:$0xff]
    %v63 = vld [vmem:[#allocation5 + $0x18] sm:$0xff]
    %v64 = vld [vmem:[#allocation5 + $0x20] sm:$0xff]
    %v65 = vld [vmem:[#allocation5 + $0x28] sm:$0xff]
    %v66 = vld [vmem:[#allocation5 + $0x30] sm:$0xff]
    %v67 = vld [vmem:[#allocation5 + $0x38] sm:$0xff]
    %v68 = vld [vmem:[#allocation5 + $0x40] sm:$0xff]
    %v69 = vld [vmem:[#allocation5 + $0x48] sm:$0xff]
    %v70 = vld [vmem:[#allocation5 + $0x50] sm:$0xff]
    %v71 = vld [vmem:[#allocation5 + $0x58] sm:$0xff]
    %v72 = vld [vmem:[#allocation5 + $0x60] sm:$0xff]
    %v73 = vld [vmem:[#allocation5 + $0x68] sm:$0xff]
    %v74 = vld [vmem:[#allocation5 + $0x70] sm:$0xff]
    %v75 = vld [vmem:[#allocation5 + $0x78] sm:$0xff]
    %76 = vmatprep.subr.mxu0 0.0
    %77 = vmatpush1.msra.mxu0 %v75
    %78 = vmatprep.subr.mxu0 0.0
    %79 = vmatpush1.msra.mxu0 %v74
    %80 = vmatprep.subr.mxu0 0.0
    %81 = vmatpush1.msra.mxu0 %v73
    %82 = vmatprep.subr.mxu0 0.0
    %83 = vmatpush1.msra.mxu0 %v72
    %84 = vmatprep.subr.mxu0 0.0
    %85 = vmatpush1.msra.mxu0 %v71
    %86 = vmatprep.subr.mxu0 0.0
    %87 = vmatpush1.msra.mxu0 %v70
    %88 = vmatprep.subr.mxu0 0.0
    %89 = vmatpush1.msra.mxu0 %v69
    %90 = vmatprep.subr.mxu0 0.0
    %91 = vmatpush1.msra.mxu0 %v68
    %92 = vmatprep.subr.mxu0 0.0
    %93 = vmatpush1.msra.mxu0 %v67
    %94 = vmatprep.subr.mxu0 0.0
    %95 = vmatpush1.msra.mxu0 %v66
    %96 = vmatprep.subr.mxu0 0.0
    %97 = vmatpush1.msra.mxu0 %v65
    %98 = vmatprep.subr.mxu0 0.0
    %99 = vmatpush1.msra.mxu0 %v64
    %100 = vmatprep.subr.mxu0 0.0
    %101 = vmatpush1.msra.mxu0 %v63
    %102 = vmatprep.subr.mxu0 0.0
    %103 = vmatpush1.msra.mxu0 %v62
    %104 = vmatprep.subr.mxu0 0.0
    %105 = vmatpush1.msra.mxu0 %v61
    %106 = vmatprep.subr.mxu0 0.0
    %107 = vmatpush1.msra.mxu0 %v60
    %108 = vmatprep.subr.mxu0 0.0
    %109 = vmatpush2.msra.mxu0 0.0
    %110 = vmatprep.subr.mxu0 0.0
    %111 = vmatpush2.msra.mxu0 0.0
    %112 = vmatprep.subr.mxu0 0.0
    %113 = vmatpush2.msra.mxu0 0.0
    %114 = vmatprep.subr.mxu0 0.0
    %115 = vmatpush2.msra.mxu0 0.0
    %116 = vmatprep.subr.mxu0 0.0
    %117 = vmatpush2.msra.mxu0 0.0
    %118 = vmatprep.subr.mxu0 0.0
    %119 = vmatpush2.msra.mxu0 0.0
    %120 = vmatprep.subr.mxu0 0.0
    %121 = vmatpush2.msra.mxu0 0.0
    %122 = vmatprep.subr.mxu0 0.0
    %123 = vmatpush2.msra.mxu0 0.0
    %124 = vmatprep.subr.mxu0 0.0
    %125 = vmatpush2.msra.mxu0 0.0
    %126 = vmatprep.subr.mxu0 0.0
    %127 = vmatpush2.msra.mxu0 0.0
    %128 = vmatprep.subr.mxu0 0.0
    %129 = vmatpush2.msra.mxu0 0.0
    %130 = vmatprep.subr.mxu0 0.0
    %131 = vmatpush2.msra.mxu0 0.0
    %132 = vmatprep.subr.mxu0 0.0
    %133 = vmatpush2.msra.mxu0 0.0
    %134 = vmatprep.subr.mxu0 0.0
    %135 = vmatpush2.msra.mxu0 0.0
    %136 = vmatprep.subr.mxu0 0.0
    %137 = vmatpush2.msra.mxu0 0.0
    %138 = vmatprep.subr.mxu0 0.0
    %139 = vmatpush2.msra.mxu0 0.0
    %140 = vmatprep.mubr.f32.mxu0 0.0
    %141 = vmatmul.mubr.f32.gmra.mxu0 %v58
    %v142 = vpop.f32.mrf.mxu0
    %v143 = vadd.f32 0.0, %v142
    %v144 = vpop.f32.mrf.mxu0
    %145 = vmatprep.mubr.f32.mxu0 0.0
    %146 = vmatmul.mubr.f32.gmra.mxu0 %v59
    %v147 = vpop.f32.mrf.mxu0
    %v148 = vadd.f32 0.0, %v147
    %v149 = vpop.f32.mrf.mxu0
    %150 = vdwg.mxu0
    %v151 = vadd.f32 %v56, %v143
    %v152 = vadd.f32 %v57, %v148
    %153 = vst [vmem:[#allocation7] sm:$0xff] %v151
    %154 = vst [vmem:[#allocation7 + $0x8] sm:$0xff] %v152
    // Predicated region
    $region26: #{tpu_custom_call.1} parent=1 // pred_check
      _
    $region27: #{tpu_custom_call.1} parent=1 // pred_check_branch
      %156 = sbr.rel (0) target = $region29
    $region28: #{tpu_custom_call.1} parent=1 // pred_region
      %s158 = ssub.s32 256, 256
      %159 = vsyncadd [#allocation4], %s158
      %s160 = sshll.u32 [#allocation7], 4
      %s161 = int_to_ptr.vmem [resolvable:$true] %s160
      %166 = dma.vmem_to_hbm [thread:$0]  %s161, 256, %s3, [#allocation4], 128, 128, 8
    $region29: #{tpu_custom_call.1} parent=1 // pred_fallthru
      _
    // Predicated region
    $region30: #{tpu_custom_call.1} parent=1 // pred_check
      _
    $region31: #{tpu_custom_call.1} parent=1 // pred_check_branch
      %168 = sbr.rel (0) target = $region33
    $region32: #{tpu_custom_call.1} parent=1 // pred_region
      %169 = dma.done [#allocation4], 256
    $region33: #{tpu_custom_call.1} parent=1 // pred_fallthru
      _
    %170 = vsyncpa [#allocation3], 1
    %171 = vsyncpa [#allocation6], 1
    %172 = vsyncpa [#allocation4], 1

</llo_original>
